<compile_context>
chip_gen: v6e
topology: v6e:2x2x1
jax: 0.10.0
libtpu: 0.0.40
codegen_flags: <defaults>
</compile_context>

<pallas_src>
import functools

import jax
import jax.numpy as jnp
from jax import lax
from jax.experimental import pallas as pl
from jax.experimental.pallas import tpu as pltpu


def _round_up(x, m):
    return (x + m - 1) // m * m


def _meanflow_kernel(x0_ref, cond_ref, wx_ref, wc_ref, wt_ref, bv_ref,
                     freqs_ref, scale_ref, off_ref, o_ref,
                     *, num_steps, dt, time_scale):
    # Per-tile shapes: x0 (Rt, Dp), cond (Rt, C). Weights are full-extent with
    # constant index maps, so they are not re-fetched across row tiles.
    wx = wx_ref[...]                       # (Dp, Dp)
    wc = wc_ref[...]                       # (C, Dp)
    wt = wt_ref[...]                       # (2*Dt, Dp)
    bv = bv_ref[...]                       # (1, Dp)
    freqs = freqs_ref[...]                 # (1, Dt//2)

    # Loop-invariant: cond projection + bias (hoisted out of the Euler loop).
    cond_proj = jnp.dot(cond_ref[...], wc,
                        preferred_element_type=jnp.float32) + bv       # (Rt, Dp)

    # ---- Time-embedding table, hoisted out of the Euler loop. -------------
    # t is pinned at 1.0 (t_end) for every step; r_i = i * dt (t_start = 0).
    half_rows = wt.shape[0] // 2           # rows of W_t consumed by the t-half
    t_scaled = jnp.float32(1.0 * time_scale)
    ang_t = freqs * t_scaled                                            # (1, Dt//2)
    temb_t = jnp.concatenate([jnp.sin(ang_t), jnp.cos(ang_t)], axis=-1)  # (1, Dt)
    steps = lax.broadcasted_iota(jnp.int32, (num_steps, freqs.shape[1]), 0)
    ang_r = steps.astype(jnp.float32) * jnp.float32(dt * time_scale) * freqs
    temb_r = jnp.concatenate([jnp.sin(ang_r), jnp.cos(ang_r)], axis=-1)  # (S, Dt)
    # concat([temb_t, temb_r]) @ W_t == temb_t @ W_t[:Dt] + temb_r @ W_t[Dt:]
    # (splitting avoids a lane concat of mismatched row counts).
    tproj_t = jnp.dot(temb_t, wt[:half_rows],
                      preferred_element_type=jnp.float32)               # (1, Dp)
    tproj_r = jnp.dot(temb_r, wt[half_rows:],
                      preferred_element_type=jnp.float32)               # (S, Dp)
    tproj_table = tproj_t + tproj_r                                     # (S, Dp)

    # ---- Euler loop: fully unrolled (num_steps is a static Python int). ----
    # Only x @ W_x + fma + tanh remain on the serial critical path.
    dt_f = jnp.float32(dt)
    x = x0_ref[...]
    for s in range(num_steps):
        h = jnp.dot(x, wx, preferred_element_type=jnp.float32)
        h = h + cond_proj + tproj_table[s:s + 1, :]
        # sample_euler: x += velocity(...) * dt
        x = x + dt_f * jnp.tanh(h)

    # denorm_spec as one FMA: scale = 0.5*(smax-smin), off = scale + smin.
    o_ref[...] = (x * scale_ref[...] + off_ref[...]).astype(o_ref.dtype)


def meanflow_infer(condition, noise, w_x, w_c, w_t, b_v, freqs,
                   spec_min, spec_max, *, sampling_steps, time_scale_factor,
                   row_tile=256):
    """MeanFlow.forward(condition, infer=True) with a synthetic backbone.

    condition: (B, T, C) float32
    noise:     (B, T, D) float32  (the randn in `inference`, layout-adapted)
    returns:   (B, T, D) float32  (denormed spec)
    """
    B, T, C = condition.shape
    D = w_x.shape[0]
    dt = 1.0 / max(1, sampling_steps)  # t_start = 0.0

    # Flatten frames across (B, T); pad mel bins to a lane-dense multiple of 128.
    R = B * T
    Dp = _round_up(D, 128)
    Rb = min(row_tile, _round_up(R, 8))     # row tile (multiple of 8)
    Rp = _round_up(R, Rb)

    def pad2(a, rows, cols):
        return jnp.pad(a, ((0, rows - a.shape[0]), (0, cols - a.shape[1])))

    x0 = pad2(noise.reshape(R, D).astype(jnp.float32), Rp, Dp)
    cond2 = pad2(condition.reshape(R, C).astype(jnp.float32), Rp, C)
    # Zero-padded weights: padded output lanes stay exactly 0 through the loop.
    wx_p = pad2(w_x, Dp, Dp)
    wc_p = pad2(w_c, C, Dp)
    wt_p = pad2(w_t, w_t.shape[0], Dp)
    bv_p = pad2(b_v, 1, Dp)
    scale = 0.5 * (spec_max - spec_min)
    off = scale + spec_min
    scale_p = pad2(scale, 1, Dp)
    off_p = pad2(off, 1, Dp)

    kernel = functools.partial(
        _meanflow_kernel,
        num_steps=sampling_steps, dt=dt, time_scale=float(time_scale_factor))

    row_spec = lambda lanes: pl.BlockSpec((Rb, lanes), lambda r: (r, 0))
    full_spec = lambda shape: pl.BlockSpec(shape, lambda r: (0, 0))

    flops = 2 * Rp * Dp * Dp * sampling_steps + 2 * Rp * C * Dp
    transcendentals = Rp * Dp * sampling_steps
    bytes_accessed = 4 * (2 * Rp * Dp + Rp * C + Dp * Dp + C * Dp
                          + wt_p.size + 3 * Dp + freqs.size)

    out = pl.pallas_call(
        kernel,
        out_shape=jax.ShapeDtypeStruct((Rp, Dp), jnp.float32),
        grid_spec=pltpu.PrefetchScalarGridSpec(
            num_scalar_prefetch=0,
            grid=(Rp // Rb,),
            in_specs=[
                row_spec(Dp),               # noise x0
                row_spec(C),                # cond
                full_spec(wx_p.shape),      # W_x
                full_spec(wc_p.shape),      # W_c
                full_spec(wt_p.shape),      # W_t
                full_spec(bv_p.shape),      # bias
                full_spec(freqs.shape),     # time-embedding freqs
                full_spec(scale_p.shape),   # denorm scale
                full_spec(off_p.shape),     # denorm offset
            ],
            out_specs=row_spec(Dp),
        ),
        compiler_params=pltpu.CompilerParams(
            dimension_semantics=("parallel",)),
        cost_estimate=pl.CostEstimate(
            flops=int(flops),
            transcendentals=int(transcendentals),
            bytes_accessed=int(bytes_accessed)),
    )(x0, cond2, wx_p, wc_p, wt_p, bv_p, freqs, scale_p, off_p)

    return out[:R, :D].reshape(B, T, D)


def meanflow_infer_ref(condition, noise, w_x, w_c, w_t, b_v, freqs,
                       spec_min, spec_max, *, sampling_steps, time_scale_factor):
    """Pure-JAX reference for correctness checking."""
    dt = 1.0 / max(1, sampling_steps)
    t_scaled = 1.0 * time_scale_factor
    temb_t = jnp.concatenate(
        [jnp.sin(freqs * t_scaled), jnp.cos(freqs * t_scaled)], axis=-1)
    cond_proj = jnp.einsum('btc,cd->btd', condition, w_c) + b_v[None]
    x = noise
    for i in range(sampling_steps):
        r_scaled = (i * dt) * time_scale_factor
        temb_r = jnp.concatenate(
            [jnp.sin(freqs * r_scaled), jnp.cos(freqs * r_scaled)], axis=-1)
        emb = jnp.concatenate([temb_t, temb_r], axis=-1)        # (1, 2*Dt)
        tproj = emb @ w_t                                        # (1, D)
        v = jnp.tanh(jnp.einsum('btd,de->bte', x, w_x) + cond_proj + tproj[None])
        x = x + dt * v
    return (x + 1.0) * 0.5 * (spec_max[None] - spec_min[None]) + spec_min[None]


if __name__ == "__main__":
    # Small deterministic config.
    B, T, C, D = 2, 16, 8, 32            # batch, frames, cond channels, out_dims
    DT_EMB = 16                          # time-embedding width (per t / r)
    SAMPLING_STEPS = 4
    TIME_SCALE_FACTOR = 1000

    key = jax.random.PRNGKey(0)
    k_cond, k_noise, k_wx, k_wc, k_wt, k_b = jax.random.split(key, 6)

    condition = jax.random.normal(k_cond, (B, T, C), jnp.float32)
    noise = jax.random.normal(k_noise, (B, T, D), jnp.float32)

    # Deterministic synthetic backbone weights.
    w_x = jax.random.normal(k_wx, (D, D), jnp.float32) * (1.0 / jnp.sqrt(D))
    w_c = jax.random.normal(k_wc, (C, D), jnp.float32) * (1.0 / jnp.sqrt(C))
    w_t = jax.random.normal(k_wt, (2 * DT_EMB, D), jnp.float32) * 0.1
    b_v = jax.random.normal(k_b, (1, D), jnp.float32) * 0.01

    half = DT_EMB // 2
    freqs = jnp.exp(
        -jnp.log(10000.0) * jnp.arange(half, dtype=jnp.float32) / half
    )[None, :]                                              # (1, DT_EMB//2)

    # spec_min / spec_max buffers (shape (1, D), broadcast over frames).
    spec_min = (-6.0 + 0.05 * jnp.arange(D, dtype=jnp.float32))[None, :]
    spec_max = (1.5 + 0.02 * jnp.arange(D, dtype=jnp.float32))[None, :]

    out = meanflow_infer(
        condition, noise, w_x, w_c, w_t, b_v, freqs, spec_min, spec_max,
        sampling_steps=SAMPLING_STEPS, time_scale_factor=TIME_SCALE_FACTOR)
    out = jax.block_until_ready(out)

    ref = meanflow_infer_ref(
        condition, noise, w_x, w_c, w_t, b_v, freqs, spec_min, spec_max,
        sampling_steps=SAMPLING_STEPS, time_scale_factor=TIME_SCALE_FACTOR)

    assert out.shape == (B, T, D)
    assert jnp.all(jnp.isfinite(out))
    assert jnp.allclose(out, ref, atol=1e-4, rtol=1e-4), "mismatch vs reference"

    print("KERNEL_OK")
</pallas_src>

<mosaic_0001>
module attributes {stable_mosaic.version = 11 : i64} {
  func.func @_meanflow_kernel(%arg0: i32, %arg1: memref<32x128xf32, #tpu.memory_space<vmem>>, %arg2: memref<32x8xf32, #tpu.memory_space<vmem>>, %arg3: memref<128x128xf32, #tpu.memory_space<vmem>>, %arg4: memref<8x128xf32, #tpu.memory_space<vmem>>, %arg5: memref<32x128xf32, #tpu.memory_space<vmem>>, %arg6: memref<1x128xf32, #tpu.memory_space<vmem>>, %arg7: memref<1x8xf32, #tpu.memory_space<vmem>>, %arg8: memref<1x128xf32, #tpu.memory_space<vmem>>, %arg9: memref<1x128xf32, #tpu.memory_space<vmem>>, %arg10: memref<32x128xf32, #tpu.memory_space<vmem>>) attributes {dimension_semantics = [#tpu.dimension_semantics<parallel>], iteration_bounds = array<i64: 1>, scalar_prefetch = 0 : i64, scratch_operands = 0 : i64, tpu.core_type = #tpu.core_type<tc>, window_params = [{transform_indices = @transform_0, window_bounds = array<i64: 32, 128>}, {transform_indices = @transform_1, window_bounds = array<i64: 32, 8>}, {pipeline_mode = #tpu.pipeline_mode<synchronous>, transform_indices = @transform_2, window_bounds = array<i64: 128, 128>}, {pipeline_mode = #tpu.pipeline_mode<synchronous>, transform_indices = @transform_3, window_bounds = array<i64: 8, 128>}, {pipeline_mode = #tpu.pipeline_mode<synchronous>, transform_indices = @transform_4, window_bounds = array<i64: 32, 128>}, {pipeline_mode = #tpu.pipeline_mode<synchronous>, transform_indices = @transform_5, window_bounds = array<i64: 1, 128>}, {pipeline_mode = #tpu.pipeline_mode<synchronous>, transform_indices = @transform_6, window_bounds = array<i64: 1, 8>}, {pipeline_mode = #tpu.pipeline_mode<synchronous>, transform_indices = @transform_7, window_bounds = array<i64: 1, 128>}, {pipeline_mode = #tpu.pipeline_mode<synchronous>, transform_indices = @transform_8, window_bounds = array<i64: 1, 128>}, {transform_indices = @transform_9, window_bounds = array<i64: 32, 128>}]} {
    %c0 = arith.constant 0 : index
    %c0_0 = arith.constant 0 : index
    %0 = vector.load %arg3[%c0, %c0_0] : memref<128x128xf32, #tpu.memory_space<vmem>>, vector<128x128xf32>
    %c0_1 = arith.constant 0 : index
    %c0_2 = arith.constant 0 : index
    %1 = vector.load %arg4[%c0_1, %c0_2] : memref<8x128xf32, #tpu.memory_space<vmem>>, vector<8x128xf32>
    %c0_3 = arith.constant 0 : index
    %c0_4 = arith.constant 0 : index
    %2 = vector.load %arg5[%c0_3, %c0_4] : memref<32x128xf32, #tpu.memory_space<vmem>>, vector<32x128xf32>
    %c0_5 = arith.constant 0 : index
    %c0_6 = arith.constant 0 : index
    %3 = vector.load %arg6[%c0_5, %c0_6] : memref<1x128xf32, #tpu.memory_space<vmem>>, vector<1x128xf32>
    %c0_7 = arith.constant 0 : index
    %c0_8 = arith.constant 0 : index
    %4 = vector.load %arg7[%c0_7, %c0_8] : memref<1x8xf32, #tpu.memory_space<vmem>>, vector<1x8xf32>
    %c0_9 = arith.constant 0 : index
    %c0_10 = arith.constant 0 : index
    %5 = vector.load %arg2[%c0_9, %c0_10] : memref<32x8xf32, #tpu.memory_space<vmem>>, vector<32x8xf32>
    %cst = arith.constant dense<0.000000e+00> : vector<32x128xf32>
    %6 = tpu.matmul %5, %1, %cst {dimension_numbers = #tpu.dot_dimension_numbers<[1], [0], [0], [1], [0, 0, 1, 1], [], []>} : vector<32x8xf32>, vector<8x128xf32>, vector<32x128xf32> -> vector<32x128xf32>
    %7 = vector.broadcast %3 : vector<1x128xf32> to vector<32x128xf32>
    %8 = arith.addf %6, %7 : vector<32x128xf32>
    %cst_11 = arith.constant 1.000000e+03 : f32
    %9 = vector.broadcast %cst_11 : f32 to vector<1x8xf32>
    %10 = arith.mulf %4, %9 : vector<1x8xf32>
    %11 = math.sin %10 : vector<1x8xf32>
    %12 = math.cos %10 : vector<1x8xf32>
    %13 = tpu.concatenate %11, %12 in 1 : vector<1x8xf32>, vector<1x8xf32> -> vector<1x16xf32>
    %14 = tpu.iota {dimensions = array<i32: 0>} : vector<4x8xi32>
    %15 = arith.sitofp %14 : vector<4x8xi32> to vector<4x8xf32>
    %cst_12 = arith.constant 2.500000e+02 : f32
    %16 = vector.broadcast %cst_12 : f32 to vector<4x8xf32>
    %17 = arith.mulf %15, %16 : vector<4x8xf32>
    %18 = vector.broadcast %4 : vector<1x8xf32> to vector<4x8xf32>
    %19 = arith.mulf %17, %18 : vector<4x8xf32>
    %20 = math.sin %19 : vector<4x8xf32>
    %21 = math.cos %19 : vector<4x8xf32>
    %22 = tpu.concatenate %20, %21 in 1 : vector<4x8xf32>, vector<4x8xf32> -> vector<4x16xf32>
    %23 = vector.extract_strided_slice %2 {offsets = [0, 0], sizes = [16, 128], strides = [1, 1]} : vector<32x128xf32> to vector<16x128xf32>
    %cst_13 = arith.constant dense<0.000000e+00> : vector<1x128xf32>
    %24 = tpu.matmul %13, %23, %cst_13 {dimension_numbers = #tpu.dot_dimension_numbers<[1], [0], [0], [1], [0, 0, 1, 1], [], []>} : vector<1x16xf32>, vector<16x128xf32>, vector<1x128xf32> -> vector<1x128xf32>
    %25 = vector.extract_strided_slice %2 {offsets = [16, 0], sizes = [16, 128], strides = [1, 1]} : vector<32x128xf32> to vector<16x128xf32>
    %cst_14 = arith.constant dense<0.000000e+00> : vector<4x128xf32>
    %26 = tpu.matmul %22, %25, %cst_14 {dimension_numbers = #tpu.dot_dimension_numbers<[1], [0], [0], [1], [0, 0, 1, 1], [], []>} : vector<4x16xf32>, vector<16x128xf32>, vector<4x128xf32> -> vector<4x128xf32>
    %27 = vector.broadcast %24 : vector<1x128xf32> to vector<4x128xf32>
    %28 = arith.addf %27, %26 : vector<4x128xf32>
    %c0_15 = arith.constant 0 : index
    %c0_16 = arith.constant 0 : index
    %29 = vector.load %arg1[%c0_15, %c0_16] : memref<32x128xf32, #tpu.memory_space<vmem>>, vector<32x128xf32>
    %cst_17 = arith.constant dense<0.000000e+00> : vector<32x128xf32>
    %30 = tpu.matmul %29, %0, %cst_17 {dimension_numbers = #tpu.dot_dimension_numbers<[1], [0], [0], [1], [0, 0, 1, 1], [], []>} : vector<32x128xf32>, vector<128x128xf32>, vector<32x128xf32> -> vector<32x128xf32>
    %31 = arith.addf %30, %8 : vector<32x128xf32>
    %32 = vector.extract_strided_slice %28 {offsets = [0, 0], sizes = [1, 128], strides = [1, 1]} : vector<4x128xf32> to vector<1x128xf32>
    %33 = vector.broadcast %32 : vector<1x128xf32> to vector<32x128xf32>
    %34 = arith.addf %31, %33 : vector<32x128xf32>
    %35 = math.tanh %34 : vector<32x128xf32>
    %cst_18 = arith.constant 2.500000e-01 : f32
    %36 = vector.broadcast %cst_18 : f32 to vector<32x128xf32>
    %37 = arith.mulf %36, %35 : vector<32x128xf32>
    %38 = arith.addf %29, %37 : vector<32x128xf32>
    %cst_19 = arith.constant dense<0.000000e+00> : vector<32x128xf32>
    %39 = tpu.matmul %38, %0, %cst_19 {dimension_numbers = #tpu.dot_dimension_numbers<[1], [0], [0], [1], [0, 0, 1, 1], [], []>} : vector<32x128xf32>, vector<128x128xf32>, vector<32x128xf32> -> vector<32x128xf32>
    %40 = arith.addf %39, %8 : vector<32x128xf32>
    %41 = vector.extract_strided_slice %28 {offsets = [1, 0], sizes = [1, 128], strides = [1, 1]} : vector<4x128xf32> to vector<1x128xf32>
    %42 = vector.broadcast %41 : vector<1x128xf32> to vector<32x128xf32>
    %43 = arith.addf %40, %42 : vector<32x128xf32>
    %44 = math.tanh %43 : vector<32x128xf32>
    %cst_20 = arith.constant 2.500000e-01 : f32
    %45 = vector.broadcast %cst_20 : f32 to vector<32x128xf32>
    %46 = arith.mulf %45, %44 : vector<32x128xf32>
    %47 = arith.addf %38, %46 : vector<32x128xf32>
    %cst_21 = arith.constant dense<0.000000e+00> : vector<32x128xf32>
    %48 = tpu.matmul %47, %0, %cst_21 {dimension_numbers = #tpu.dot_dimension_numbers<[1], [0], [0], [1], [0, 0, 1, 1], [], []>} : vector<32x128xf32>, vector<128x128xf32>, vector<32x128xf32> -> vector<32x128xf32>
    %49 = arith.addf %48, %8 : vector<32x128xf32>
    %50 = vector.extract_strided_slice %28 {offsets = [2, 0], sizes = [1, 128], strides = [1, 1]} : vector<4x128xf32> to vector<1x128xf32>
    %51 = vector.broadcast %50 : vector<1x128xf32> to vector<32x128xf32>
    %52 = arith.addf %49, %51 : vector<32x128xf32>
    %53 = math.tanh %52 : vector<32x128xf32>
    %cst_22 = arith.constant 2.500000e-01 : f32
    %54 = vector.broadcast %cst_22 : f32 to vector<32x128xf32>
    %55 = arith.mulf %54, %53 : vector<32x128xf32>
    %56 = arith.addf %47, %55 : vector<32x128xf32>
    %cst_23 = arith.constant dense<0.000000e+00> : vector<32x128xf32>
    %57 = tpu.matmul %56, %0, %cst_23 {dimension_numbers = #tpu.dot_dimension_numbers<[1], [0], [0], [1], [0, 0, 1, 1], [], []>} : vector<32x128xf32>, vector<128x128xf32>, vector<32x128xf32> -> vector<32x128xf32>
    %58 = arith.addf %57, %8 : vector<32x128xf32>
    %59 = vector.extract_strided_slice %28 {offsets = [3, 0], sizes = [1, 128], strides = [1, 1]} : vector<4x128xf32> to vector<1x128xf32>
    %60 = vector.broadcast %59 : vector<1x128xf32> to vector<32x128xf32>
    %61 = arith.addf %58, %60 : vector<32x128xf32>
    %62 = math.tanh %61 : vector<32x128xf32>
    %cst_24 = arith.constant 2.500000e-01 : f32
    %63 = vector.broadcast %cst_24 : f32 to vector<32x128xf32>
    %64 = arith.mulf %63, %62 : vector<32x128xf32>
    %65 = arith.addf %56, %64 : vector<32x128xf32>
    %c0_25 = arith.constant 0 : index
    %c0_26 = arith.constant 0 : index
    %66 = vector.load %arg8[%c0_25, %c0_26] : memref<1x128xf32, #tpu.memory_space<vmem>>, vector<1x128xf32>
    %67 = vector.broadcast %66 : vector<1x128xf32> to vector<32x128xf32>
    %68 = arith.mulf %65, %67 : vector<32x128xf32>
    %c0_27 = arith.constant 0 : index
    %c0_28 = arith.constant 0 : index
    %69 = vector.load %arg9[%c0_27, %c0_28] : memref<1x128xf32, #tpu.memory_space<vmem>>, vector<1x128xf32>
    %70 = vector.broadcast %69 : vector<1x128xf32> to vector<32x128xf32>
    %71 = arith.addf %68, %70 : vector<32x128xf32>
    %c0_29 = arith.constant 0 : index
    %c0_30 = arith.constant 0 : index
    %72 = vector.load %arg10[%c0_29, %c0_30] : memref<32x128xf32, #tpu.memory_space<vmem>>, vector<32x128xf32>
    tpu.vector_store %arg10[%c0_29, %c0_30], %71 {strides = array<i32>} : memref<32x128xf32, #tpu.memory_space<vmem>>, vector<32x128xf32>,
    return
  }
  func.func @transform_0(%arg0: i32) -> (i32, i32) {
    %c0_i32 = arith.constant 0 : i32
    %c0_i32_0 = arith.constant 0 : i32
    return %arg0, %c0_i32 : i32, i32
  }
  func.func @transform_1(%arg0: i32) -> (i32, i32) {
    %c0_i32 = arith.constant 0 : i32
    %c0_i32_0 = arith.constant 0 : i32
    return %arg0, %c0_i32 : i32, i32
  }
  func.func @transform_2(%arg0: i32) -> (i32, i32) {
    %c0_i32 = arith.constant 0 : i32
    %c0_i32_0 = arith.constant 0 : i32
    %c0_i32_1 = arith.constant 0 : i32
    return %c0_i32, %c0_i32_0 : i32, i32
  }
  func.func @transform_3(%arg0: i32) -> (i32, i32) {
    %c0_i32 = arith.constant 0 : i32
    %c0_i32_0 = arith.constant 0 : i32
    %c0_i32_1 = arith.constant 0 : i32
    return %c0_i32, %c0_i32_0 : i32, i32
  }
  func.func @transform_4(%arg0: i32) -> (i32, i32) {
    %c0_i32 = arith.constant 0 : i32
    %c0_i32_0 = arith.constant 0 : i32
    %c0_i32_1 = arith.constant 0 : i32
    return %c0_i32, %c0_i32_0 : i32, i32
  }
  func.func @transform_5(%arg0: i32) -> (i32, i32) {
    %c0_i32 = arith.constant 0 : i32
    %c0_i32_0 = arith.constant 0 : i32
    %c0_i32_1 = arith.constant 0 : i32
    return %c0_i32, %c0_i32_0 : i32, i32
  }
  func.func @transform_6(%arg0: i32) -> (i32, i32) {
    %c0_i32 = arith.constant 0 : i32
    %c0_i32_0 = arith.constant 0 : i32
    %c0_i32_1 = arith.constant 0 : i32
    return %c0_i32, %c0_i32_0 : i32, i32
  }
  func.func @transform_7(%arg0: i32) -> (i32, i32) {
    %c0_i32 = arith.constant 0 : i32
    %c0_i32_0 = arith.constant 0 : i32
    %c0_i32_1 = arith.constant 0 : i32
    return %c0_i32, %c0_i32_0 : i32, i32
  }
  func.func @transform_8(%arg0: i32) -> (i32, i32) {
    %c0_i32 = arith.constant 0 : i32
    %c0_i32_0 = arith.constant 0 : i32
    %c0_i32_1 = arith.constant 0 : i32
    return %c0_i32, %c0_i32_0 : i32, i32
  }
  func.func @transform_9(%arg0: i32) -> (i32, i32) {
    %c0_i32 = arith.constant 0 : i32
    %c0_i32_0 = arith.constant 0 : i32
    return %arg0, %c0_i32 : i32, i32
  }
}

</mosaic_0001>

<llo_original>
// kernel: tpu_custom_call.1
$region0: #{tpu_custom_call.1}
  #allocation0 [shape = 'u32[]', space=smem, size = 0x4, offset = 0x4, fixed_abs, tag = 'smem constant byte address 0x4 - core index']
  #allocation1 [shape = 'u32[144,128]{1,0:T(1,128)}', space=vmem, size = 0x12000, scoped, tag = 'internal scratch']
  %s0 = inlined_call_operand.vmem [shape: f32[32,128], index: 0, kind: input, shape index: {}]
  %s1 = inlined_call_operand.vmem [shape: f32[32,8], index: 1, kind: input, shape index: {}]
  %s2 = inlined_call_operand.hbm [shape: f32[128,128], index: 2, kind: input, shape index: {}]
  %s3 = inlined_call_operand.vmem [shape: f32[8,128], index: 3, kind: input, shape index: {}]
  %s4 = inlined_call_operand.hbm [shape: f32[32,128], index: 4, kind: input, shape index: {}]
  %s5 = inlined_call_operand.vmem [shape: f32[1,128], index: 5, kind: input, shape index: {}]
  %s6 = inlined_call_operand.vmem [shape: f32[1,8], index: 6, kind: input, shape index: {}]
  %s7 = inlined_call_operand.vmem [shape: f32[1,128], index: 7, kind: input, shape index: {}]
  %s8 = inlined_call_operand.vmem [shape: f32[1,128], index: 8, kind: input, shape index: {}]
  %s9 = inlined_call_operand.hbm [shape: f32[32,128], index: 9, kind: output, shape index: {}]
  %s10 = sld [smem:[#allocation0]]
  $region54: #{tpu_custom_call.1} parent=0
    _
  %s12 = ssub.s32 1, %s10
  %s13 = scalar_select 0, %s12, %s10
  $region1: #{tpu_custom_call.1} parent=0
    #allocation2 [shape = 'u8[65536]{0}', space=vmem, size = 0x10000, scoped, tag = 'input window, operand 2, single buffered']
    #allocation3 [shape = 's32[1]{0}', space=sflag, size = 0x4, scoped, tag = 'scoped memory for tpu_custom_call.1']
    #allocation4 [shape = 's32[1]{0}', space=sflag, size = 0x4, scoped, tag = 'scoped memory for tpu_custom_call.1']
    #allocation5 [shape = 'u8[16384]{0}', space=vmem, size = 0x4000, scoped, tag = 'input window, operand 4, single buffered']
    #allocation6 [shape = 's32[1]{0}', space=sflag, size = 0x4, scoped, tag = 'scoped memory for tpu_custom_call.1']
    #allocation7 [shape = 'u8[16384]{0}', space=vmem, size = 0x4000, scoped, tag = 'output window, operand 0, single buffered']
    %14 = vsyncpa [#allocation3], 0
    %15 = vsyncpa [#allocation6], 0
    %16 = vsyncpa [#allocation4], 0
    // Predicated region
    $region2: #{tpu_custom_call.1} parent=1 // pred_check
      _
    $region3: #{tpu_custom_call.1} parent=1 // pred_check_branch
      %18 = sbr.rel (0) target = $region5
    $region4: #{tpu_custom_call.1} parent=1 // pred_region
      _
    $region5: #{tpu_custom_call.1} parent=1 // pred_fallthru
      _
    // Predicated region
    $region6: #{tpu_custom_call.1} parent=1 // pred_check
      _
    $region7: #{tpu_custom_call.1} parent=1 // pred_check_branch
      %20 = sbr.rel (0) target = $region9
    $region8: #{tpu_custom_call.1} parent=1 // pred_region
      _
    $region9: #{tpu_custom_call.1} parent=1 // pred_fallthru
      _
    // Predicated region
    $region10: #{tpu_custom_call.1} parent=1 // pred_check
      _
    $region11: #{tpu_custom_call.1} parent=1 // pred_check_branch
      %22 = sbr.rel (0) target = $region13
    $region12: #{tpu_custom_call.1} parent=1 // pred_region
      %s24 = ssub.s32 2048, 2048
      %25 = vsyncadd [#allocation3], %s24
      %s26 = sshll.u32 [#allocation2], 4
      %s27 = int_to_ptr.vmem [resolvable:$true] %s26
      %32 = dma.hbm_to_vmem [thread:$0]  %s2, 2048, %s27, [#allocation3], 128, 128, 8
    $region13: #{tpu_custom_call.1} parent=1 // pred_fallthru
      _
    // Predicated region
    $region14: #{tpu_custom_call.1} parent=1 // pred_check
      _
    $region15: #{tpu_custom_call.1} parent=1 // pred_check_branch
      %34 = sbr.rel (0) target = $region17
    $region16: #{tpu_custom_call.1} parent=1 // pred_region
      _
    $region17: #{tpu_custom_call.1} parent=1 // pred_fallthru
      _
    // Predicated region
    $region18: #{tpu_custom_call.1} parent=1 // pred_check
      _
    $region19: #{tpu_custom_call.1} parent=1 // pred_check_branch
      %36 = sbr.rel (0) target = $region21
    $region20: #{tpu_custom_call.1} parent=1 // pred_region
      %s38 = ssub.s32 512, 512
      %39 = vsyncadd [#allocation6], %s38
      %s40 = sshll.u32 [#allocation5], 4
      %s41 = int_to_ptr.vmem [resolvable:$true] %s40
      %46 = dma.hbm_to_vmem [thread:$0]  %s4, 512, %s41, [#allocation6], 128, 128, 8
    $region21: #{tpu_custom_call.1} parent=1 // pred_fallthru
      _
    // Predicated region
    $region22: #{tpu_custom_call.1} parent=1 // pred_check
      _
    $region23: #{tpu_custom_call.1} parent=1 // pred_check_branch
      %48 = sbr.rel (0) target = $region25
    $region24: #{tpu_custom_call.1} parent=1 // pred_region
      _
    $region25: #{tpu_custom_call.1} parent=1 // pred_fallthru
      _
    // Predicated region
    $region26: #{tpu_custom_call.1} parent=1 // pred_check
      _
    $region27: #{tpu_custom_call.1} parent=1 // pred_check_branch
      %50 = sbr.rel (0) target = $region29
    $region28: #{tpu_custom_call.1} parent=1 // pred_region
      _
    $region29: #{tpu_custom_call.1} parent=1 // pred_fallthru
      _
    // Predicated region
    $region30: #{tpu_custom_call.1} parent=1 // pred_check
      _
    $region31: #{tpu_custom_call.1} parent=1 // pred_check_branch
      %52 = sbr.rel (0) target = $region33
    $region32: #{tpu_custom_call.1} parent=1 // pred_region
      _
    $region33: #{tpu_custom_call.1} parent=1 // pred_fallthru
      _
    // Predicated region
    $region34: #{tpu_custom_call.1} parent=1 // pred_check
      _
    $region35: #{tpu_custom_call.1} parent=1 // pred_check_branch
      %54 = sbr.rel (0) target = $region37
    $region36: #{tpu_custom_call.1} parent=1 // pred_region
      _
    $region37: #{tpu_custom_call.1} parent=1 // pred_fallthru
      _
    // Predicated region
    $region38: #{tpu_custom_call.1} parent=1 // pred_check
      _
    $region39: #{tpu_custom_call.1} parent=1 // pred_check_branch
      %56 = sbr.rel (0) target = $region41
    $region40: #{tpu_custom_call.1} parent=1 // pred_region
      %57 = dma.done [#allocation3], 2048
    $region41: #{tpu_custom_call.1} parent=1 // pred_fallthru
      _
    // Predicated region
    $region42: #{tpu_custom_call.1} parent=1 // pred_check
      _
    $region43: #{tpu_custom_call.1} parent=1 // pred_check_branch
      %59 = sbr.rel (0) target = $region45
    $region44: #{tpu_custom_call.1} parent=1 // pred_region
      %60 = dma.done [#allocation6], 512
    $region45: #{tpu_custom_call.1} parent=1 // pred_fallthru
      _
    %v61 = vld [vmem:[#allocation2] sm:$0xff]
    %v62 = vld [vmem:[#allocation2 + $0x8] sm:$0xff]
    %v63 = vld [vmem:[#allocation2 + $0x10] sm:$0xff]
    %v64 = vld [vmem:[#allocation2 + $0x18] sm:$0xff]
    %v65 = vld [vmem:[#allocation2 + $0x20] sm:$0xff]
    %v66 = vld [vmem:[#allocation2 + $0x28] sm:$0xff]
    %v67 = vld [vmem:[#allocation2 + $0x30] sm:$0xff]
    %v68 = vld [vmem:[#allocation2 + $0x38] sm:$0xff]
    %v69 = vld [vmem:[#allocation2 + $0x40] sm:$0xff]
    %v70 = vld [vmem:[#allocation2 + $0x48] sm:$0xff]
    %v71 = vld [vmem:[#allocation2 + $0x50] sm:$0xff]
    %v72 = vld [vmem:[#allocation2 + $0x58] sm:$0xff]
    %v73 = vld [vmem:[#allocation2 + $0x60] sm:$0xff]
    %v74 = vld [vmem:[#allocation2 + $0x68] sm:$0xff]
    %v75 = vld [vmem:[#allocation2 + $0x70] sm:$0xff]
    %v76 = vld [vmem:[#allocation2 + $0x78] sm:$0xff]
    %v77 = vld [vmem:[%s3] sm:$0xff]
    %v78 = vld [vmem:[#allocation5] sm:$0xff]
    %v79 = vld [vmem:[#allocation5 + $0x8] sm:$0xff]
    %v80 = vld [vmem:[#allocation5 + $0x10] sm:$0xff]
    %v81 = vld [vmem:[#allocation5 + $0x18] sm:$0xff]
    %v82 = vld [vmem:[%s5] sm:$0x1]
    %v83 = vld [vmem:[%s6] sm:$0x1]
    %v84 = vld [vmem:[%s1] sm:$0xff]
    %v85 = vld [vmem:[%s1 + $0x8] sm:$0xff]
    %v86 = vld [vmem:[%s1 + $0x10] sm:$0xff]
    %v87 = vld [vmem:[%s1 + $0x18] sm:$0xff]
    %v89 = vlaneseq
    %v90 = vshrl.u32 %v89, 7
    %v91 = vsub.s32 0, %v90
    %v92 = vrot.slane %v82, %v91
    %vm94 = vcmask 64512
    %v96 = vsel %vm94, %v84, 0
    %v99 = vsel %vm94, %v85, 0
    %v102 = vsel %vm94, %v86, 0
    %v105 = vsel %vm94, %v87, 0
    %107 = vmatprep.subr.mxu0 0.0
    %108 = vmatpush1.msra.mxu0 0.0
    %109 = vmatprep.subr.mxu0 0.0
    %110 = vmatpush1.msra.mxu0 0.0
    %111 = vmatprep.subr.mxu0 0.0
    %112 = vmatpush1.msra.mxu0 0.0
    %113 = vmatprep.subr.mxu0 0.0
    %114 = vmatpush1.msra.mxu0 0.0
    %115 = vmatprep.subr.mxu0 0.0
    %116 = vmatpush1.msra.mxu0 0.0
    %117 = vmatprep.subr.mxu0 0.0
    %118 = vmatpush1.msra.mxu0 0.0
    %119 = vmatprep.subr.mxu0 0.0
    %120 = vmatpush1.msra.mxu0 0.0
    %121 = vmatprep.subr.mxu0 0.0
    %122 = vmatpush1.msra.mxu0 0.0
    %123 = vmatprep.subr.mxu0 0.0
    %124 = vmatpush1.msra.mxu0 0.0
    %125 = vmatprep.subr.mxu0 0.0
    %126 = vmatpush1.msra.mxu0 0.0
    %127 = vmatprep.subr.mxu0 0.0
    %128 = vmatpush1.msra.mxu0 0.0
    %129 = vmatprep.subr.mxu0 0.0
    %130 = vmatpush1.msra.mxu0 0.0
    %131 = vmatprep.subr.mxu0 0.0
    %132 = vmatpush1.msra.mxu0 0.0
    %133 = vmatprep.subr.mxu0 0.0
    %134 = vmatpush1.msra.mxu0 0.0
    %135 = vmatprep.subr.mxu0 0.0
    %136 = vmatpush1.msra.mxu0 0.0
    %137 = vmatprep.subr.mxu0 0.0
    %138 = vmatpush1.msra.mxu0 %v77
    %139 = vmatprep.subr.mxu0 0.0
    %140 = vmatpush2.msra.mxu0 0.0
    %141 = vmatprep.subr.mxu0 0.0
    %142 = vmatpush2.msra.mxu0 0.0
    %143 = vmatprep.subr.mxu0 0.0
    %144 = vmatpush2.msra.mxu0 0.0
    %145 = vmatprep.subr.mxu0 0.0
    %146 = vmatpush2.msra.mxu0 0.0
    %147 = vmatprep.subr.mxu0 0.0
    %148 = vmatpush2.msra.mxu0 0.0
    %149 = vmatprep.subr.mxu0 0.0
    %150 = vmatpush2.msra.mxu0 0.0
    %151 = vmatprep.subr.mxu0 0.0
    %152 = vmatpush2.msra.mxu0 0.0
    %153 = vmatprep.subr.mxu0 0.0
    %154 = vmatpush2.msra.mxu0 0.0
    %155 = vmatprep.subr.mxu0 0.0
    %156 = vmatpush2.msra.mxu0 0.0
    %157 = vmatprep.subr.mxu0 0.0
    %158 = vmatpush2.msra.mxu0 0.0
    %159 = vmatprep.subr.mxu0 0.0
    %160 = vmatpush2.msra.mxu0 0.0
    %161 = vmatprep.subr.mxu0 0.0
    %162 = vmatpush2.msra.mxu0 0.0
    %163 = vmatprep.subr.mxu0 0.0
    %164 = vmatpush2.msra.mxu0 0.0
    %165 = vmatprep.subr.mxu0 0.0
    %166 = vmatpush2.msra.mxu0 0.0
    %167 = vmatprep.subr.mxu0 0.0
    %168 = vmatpush2.msra.mxu0 0.0
    %169 = vmatprep.subr.mxu0 0.0
    %170 = vmatpush2.msra.mxu0 0.0
    %171 = vmatprep.mubr.f32.mxu0 0.0
    %172 = vmatmul.mubr.f32.gmra.mxu0 %v96
    %v173 = vpop.f32.mrf.mxu0
    %v174 = vadd.f32 %v92, %v173
    %v175 = vpop.f32.mrf.mxu0
    %176 = vmatprep.mubr.f32.mxu0 0.0
    %177 = vmatmul.mubr.f32.gmra.mxu0 %v99
    %v178 = vpop.f32.mrf.mxu0
    %v179 = vadd.f32 %v92, %v178
    %v180 = vpop.f32.mrf.mxu0
    %181 = vmatprep.mubr.f32.mxu0 0.0
    %182 = vmatmul.mubr.f32.gmra.mxu0 %v102
    %v183 = vpop.f32.mrf.mxu0
    %v184 = vadd.f32 %v92, %v183
    %v185 = vpop.f32.mrf.mxu0
    %186 = vmatprep.mubr.f32.mxu0 0.0
    %187 = vmatmul.mubr.f32.gmra.mxu0 %v105
    %v188 = vpop.f32.mrf.mxu0
    %v189 = vadd.f32 %v92, %v188
    %v190 = vpop.f32.mrf.mxu0
    %191 = vdwg.mxu0
    %v192 = vmul.f32 %v83, 1000.0
    %v193 = vand.u32 2147483647, %v192
    %vm194 = vcmp.le.f32.partialorder %v193, 0.7853982
    %vm195 = vcmp.lt.s32.totalorder %v192, 0
    %v196 = vand.u32 %v192, 2139095040
    %v197 = vshrl.u32 %v196, 23
    %v198 = vsub.s32 %v197, 127
    %v199 = vand.u32 2147483647, %v192
    %v200 = vand.u32 %v199, 8388607
    %v201 = vor.u32 %v200, 8388608
    %v202 = vsub.s32 0, %v201
    %v203 = vadd.s32 %v198, 1
    %vm204 = vcmp.gt.s32.totalorder %v203, 0
    %v205 = vsel %vm204, %v203, 0
    %v206 = vshrl.u32 %v205, 5
    %v207 = vand.u32 %v205, 31
    %v208 = vsub.s32 32, %v207
    %v209 = vshrl.u32 683565275, %v208
    %v210 = vshll.u32 683565275, %v207
    %v211 = vshrl.u32 2475754826, %v208
    %v212 = vor.u32 %v210, %v211
    %v213 = vshll.u32 2475754826, %v207
    %v214 = vshrl.u32 2131351028, %v208
    %v215 = vor.u32 %v213, %v214
    %v216 = vshll.u32 2131351028, %v207
    %v217 = vshrl.u32 2102212464, %v208
    %v218 = vor.u32 %v216, %v217
    %v219 = vshll.u32 2102212464, %v207
    %v220 = vshrl.u32 920167782, %v208
    %v221 = vor.u32 %v219, %v220
    %v222 = vshll.u32 920167782, %v207
    %v223 = vshrl.u32 1326507024, %v208
    %v224 = vor.u32 %v222, %v223
    %vm225 = vcmp.lt.s32.totalorder %v206, 1
    %vm226 = vcmp.lt.s32.totalorder %v206, 2
    %vm227 = vcmp.lt.s32.totalorder %v206, 3
    %vm228 = vcmp.lt.s32.totalorder %v206, 4
    %v229 = vsel %vm225, %v209, %v212
    %v230 = vsel %vm228, %v218, 2102212464
    %v231 = vsel %vm227, %v215, %v230
    %v232 = vsel %vm226, %v229, %v231
    %v233 = vsel %vm225, %v212, %v215
    %v234 = vsel %vm228, %v221, 920167782
    %v235 = vsel %vm227, %v218, %v234
    %v236 = vsel %vm226, %v233, %v235
    %v237 = vsel %vm225, %v215, %v218
    %v238 = vsel %vm228, %v224, 1326507024
    %v239 = vsel %vm227, %v221, %v238
    %v240 = vsel %vm226, %v237, %v239
    %v241 = vshll.u32 %v201, 8
    %v242 = vmul.u32.u64.compose %v241, %v240
    %v243 = vextract.low.u32 %v242
    %v244 = vextract.high.u32 %v242
    %v245 = vmul.u32.u64.compose %v241, %v236
    %v246 = vextract.low.u32 %v245
    %v247 = vextract.high.u32 %v245
    %v248 = vmul.u32 %v241, %v232
    %v249 = vadd.s32 %v244, %v246
    %vm250 = vc.u32 %v244, %v246
    %v251 = vadd.s32 %v247, 1
    %v252 = vsel %vm250, %v251, %v247
    %v253 = vadd.s32 %v248, %v252
    %v254 = vadd.s32 %v253, 536870912
    %v255 = vshrl.u32 %v254, 30
    %v256 = vshll.u32 %v255, 30
    %v257 = vsub.s32 %v253, %v256
    %vm258 = vcmp.lt.s32.totalorder %v257, 0
    %v259 = vsub.s32 0, %v257
    %v260 = vsel %vm258, %v259, %v257
    %v261 = vclz %v260
    %v262 = vsub.s32 %v261, 2
    %vm263 = vcmp.gt.s32.totalorder 0, %v262
    %v264 = vsel %vm263, 0, %v262
    %v265 = vsub.s32 32, %v264
    %v266 = vshll.u32 %v257, %v264
    %v267 = vshrl.u32 %v249, %v265
    %v268 = vor.u32 %v266, %v267
    %v269 = vsub.s32 4294967266, %v264
    %v270 = vadd.s32 %v269, 127
    %v271 = vshll.u32 %v270, 23
    %v272 = vor.u32 4788187, %v271
    %v273 = vand.u32 2147483647, %v272
    %v275 = vcvt.s32.f32 %v268
    %v276 = vmul.f32 %v275, %v273
    %v277 = vxor.u32 %v276, 2147483648
    %v278 = vsel %vm195, %v277, %v276
    %v279 = vsub.s32 4, %v255
    %v280 = vsel %vm195, %v279, %v255
    %v281 = vsel %vm194, %v192, %v278
    %v282 = vsel %vm194, 0, %v280
    %v283 = vcosq.f32.pop %v281
    %v284 = vsinq.f32.pop %v281
    %vm285 = vweird.f32 %v192
    %v286 = vadd.s32 %v282, 3
    %v287 = vand.u32 %v286, 3
    %vm288 = vcmp.lt.s32.totalorder %v287, 2
    %vm289 = vcmp.eq.s32.totalorder %v287, 0
    %v290 = vxor.u32 %v284, 2147483648
    %v291 = vsel %vm289, %v283, %v290
    %vm292 = vcmp.eq.s32.totalorder %v287, 2
    %v293 = vxor.u32 %v283, 2147483648
    %v294 = vsel %vm292, %v293, %v284
    %v295 = vsel %vm288, %v291, %v294
    %v296 = vsel %vm285, nan, %v295
    %v297 = vand.u32 2147483647, %v192
    %vm298 = vcmp.le.f32.partialorder %v297, 0.7853982
    %vm299 = vcmp.lt.s32.totalorder %v192, 0
    %v300 = vand.u32 %v192, 2139095040
    %v301 = vshrl.u32 %v300, 23
    %v302 = vsub.s32 %v301, 127
    %v303 = vand.u32 2147483647, %v192
    %v304 = vand.u32 %v303, 8388607
    %v305 = vor.u32 %v304, 8388608
    %v306 = vsub.s32 0, %v305
    %v307 = vadd.s32 %v302, 1
    %vm308 = vcmp.gt.s32.totalorder %v307, 0
    %v309 = vsel %vm308, %v307, 0
    %v310 = vshrl.u32 %v309, 5
    %v311 = vand.u32 %v309, 31
    %v312 = vsub.s32 32, %v311
    %v313 = vshrl.u32 683565275, %v312
    %v314 = vshll.u32 683565275, %v311
    %v315 = vshrl.u32 2475754826, %v312
    %v316 = vor.u32 %v314, %v315
    %v317 = vshll.u32 2475754826, %v311
    %v318 = vshrl.u32 2131351028, %v312
    %v319 = vor.u32 %v317, %v318
    %v320 = vshll.u32 2131351028, %v311
    %v321 = vshrl.u32 2102212464, %v312
    %v322 = vor.u32 %v320, %v321
    %v323 = vshll.u32 2102212464, %v311
    %v324 = vshrl.u32 920167782, %v312
    %v325 = vor.u32 %v323, %v324
    %v326 = vshll.u32 920167782, %v311
    %v327 = vshrl.u32 1326507024, %v312
    %v328 = vor.u32 %v326, %v327
    %vm329 = vcmp.lt.s32.totalorder %v310, 1
    %vm330 = vcmp.lt.s32.totalorder %v310, 2
    %vm331 = vcmp.lt.s32.totalorder %v310, 3
    %vm332 = vcmp.lt.s32.totalorder %v310, 4
    %v333 = vsel %vm329, %v313, %v316
    %v334 = vsel %vm332, %v322, 2102212464
    %v335 = vsel %vm331, %v319, %v334
    %v336 = vsel %vm330, %v333, %v335
    %v337 = vsel %vm329, %v316, %v319
    %v338 = vsel %vm332, %v325, 920167782
    %v339 = vsel %vm331, %v322, %v338
    %v340 = vsel %vm330, %v337, %v339
    %v341 = vsel %vm329, %v319, %v322
    %v342 = vsel %vm332, %v328, 1326507024
    %v343 = vsel %vm331, %v325, %v342
    %v344 = vsel %vm330, %v341, %v343
    %v345 = vshll.u32 %v305, 8
    %v346 = vmul.u32.u64.compose %v345, %v344
    %v347 = vextract.low.u32 %v346
    %v348 = vextract.high.u32 %v346
    %v349 = vmul.u32.u64.compose %v345, %v340
    %v350 = vextract.low.u32 %v349
    %v351 = vextract.high.u32 %v349
    %v352 = vmul.u32 %v345, %v336
    %v353 = vadd.s32 %v348, %v350
    %vm354 = vc.u32 %v348, %v350
    %v355 = vadd.s32 %v351, 1
    %v356 = vsel %vm354, %v355, %v351
    %v357 = vadd.s32 %v352, %v356
    %v358 = vadd.s32 %v357, 536870912
    %v359 = vshrl.u32 %v358, 30
    %v360 = vshll.u32 %v359, 30
    %v361 = vsub.s32 %v357, %v360
    %vm362 = vcmp.lt.s32.totalorder %v361, 0
    %v363 = vsub.s32 0, %v361
    %v364 = vsel %vm362, %v363, %v361
    %v365 = vclz %v364
    %v366 = vsub.s32 %v365, 2
    %vm367 = vcmp.gt.s32.totalorder 0, %v366
    %v368 = vsel %vm367, 0, %v366
    %v369 = vsub.s32 32, %v368
    %v370 = vshll.u32 %v361, %v368
    %v371 = vshrl.u32 %v353, %v369
    %v372 = vor.u32 %v370, %v371
    %v373 = vsub.s32 4294967266, %v368
    %v374 = vadd.s32 %v373, 127
    %v375 = vshll.u32 %v374, 23
    %v376 = vor.u32 4788187, %v375
    %v377 = vand.u32 2147483647, %v376
    %v379 = vcvt.s32.f32 %v372
    %v380 = vmul.f32 %v379, %v377
    %v381 = vxor.u32 %v380, 2147483648
    %v382 = vsel %vm299, %v381, %v380
    %v383 = vsub.s32 4, %v359
    %v384 = vsel %vm299, %v383, %v359
    %v385 = vsel %vm298, %v192, %v382
    %v386 = vsel %vm298, 0, %v384
    %v387 = vcosq.f32.pop %v385
    %v388 = vsinq.f32.pop %v385
    %vm389 = vweird.f32 %v192
    %v390 = vand.u32 %v386, 3
    %vm391 = vcmp.lt.s32.totalorder %v390, 2
    %vm392 = vcmp.eq.s32.totalorder %v390, 0
    %v393 = vxor.u32 %v388, 2147483648
    %v394 = vsel %vm392, %v387, %v393
    %vm395 = vcmp.eq.s32.totalorder %v390, 2
    %v396 = vxor.u32 %v387, 2147483648
    %v397 = vsel %vm395, %v396, %v388
    %v398 = vsel %vm391, %v394, %v397
    %v399 = vsel %vm389, nan, %v398
    %v401 = vlaneseq
    %v402 = vshrl.u32 %v401, 7
    %v403 = vsub.s32 0, %v402
    %v404 = vrot.slane %v399, %v403
    %405 = vrot.lane.b32.xlu0 %v404, 8
    %v406 = vpop.permute.xlu0 %405
    %v408 = vsel %vm94, %v296, %v406
    %v409 = vlaneseq
    %v410 = vshrl.u32 %v409, 7
    %v411 = vcvt.s32.f32 %v410
    %v412 = vmul.f32 %v411, 250.0
    %v414 = vlaneseq
    %v415 = vshrl.u32 %v414, 7
    %v416 = vsub.s32 0, %v415
    %v417 = vrot.slane %v83, %v416
    %v419 = vmul.f32 %v412, %v417
    %v420 = vand.u32 2147483647, %v419
    %vm421 = vcmp.le.f32.partialorder %v420, 0.7853982
    %vm422 = vcmp.lt.s32.totalorder %v419, 0
    %v423 = vand.u32 %v419, 2139095040
    %v424 = vshrl.u32 %v423, 23
    %v425 = vsub.s32 %v424, 127
    %v426 = vand.u32 2147483647, %v419
    %v427 = vand.u32 %v426, 8388607
    %v428 = vor.u32 %v427, 8388608
    %v429 = vsub.s32 0, %v428
    %v430 = vadd.s32 %v425, 1
    %vm431 = vcmp.gt.s32.totalorder %v430, 0
    %v432 = vsel %vm431, %v430, 0
    %v433 = vshrl.u32 %v432, 5
    %v434 = vand.u32 %v432, 31
    %v435 = vsub.s32 32, %v434
    %v436 = vshrl.u32 683565275, %v435
    %v437 = vshll.u32 683565275, %v434
    %v438 = vshrl.u32 2475754826, %v435
    %v439 = vor.u32 %v437, %v438
    %v440 = vshll.u32 2475754826, %v434
    %v441 = vshrl.u32 2131351028, %v435
    %v442 = vor.u32 %v440, %v441
    %v443 = vshll.u32 2131351028, %v434
    %v444 = vshrl.u32 2102212464, %v435
    %v445 = vor.u32 %v443, %v444
    %v446 = vshll.u32 2102212464, %v434
    %v447 = vshrl.u32 920167782, %v435
    %v448 = vor.u32 %v446, %v447
    %v449 = vshll.u32 920167782, %v434
    %v450 = vshrl.u32 1326507024, %v435
    %v451 = vor.u32 %v449, %v450
    %vm452 = vcmp.lt.s32.totalorder %v433, 1
    %vm453 = vcmp.lt.s32.totalorder %v433, 2
    %vm454 = vcmp.lt.s32.totalorder %v433, 3
    %vm455 = vcmp.lt.s32.totalorder %v433, 4
    %v456 = vsel %vm452, %v436, %v439
    %v457 = vsel %vm455, %v445, 2102212464
    %v458 = vsel %vm454, %v442, %v457
    %v459 = vsel %vm453, %v456, %v458
    %v460 = vsel %vm452, %v439, %v442
    %v461 = vsel %vm455, %v448, 920167782
    %v462 = vsel %vm454, %v445, %v461
    %v463 = vsel %vm453, %v460, %v462
    %v464 = vsel %vm452, %v442, %v445
    %v465 = vsel %vm455, %v451, 1326507024
    %v466 = vsel %vm454, %v448, %v465
    %v467 = vsel %vm453, %v464, %v466
    %v468 = vshll.u32 %v428, 8
    %v469 = vmul.u32.u64.compose %v468, %v467
    %v470 = vextract.low.u32 %v469
    %v471 = vextract.high.u32 %v469
    %v472 = vmul.u32.u64.compose %v468, %v463
    %v473 = vextract.low.u32 %v472
    %v474 = vextract.high.u32 %v472
    %v475 = vmul.u32 %v468, %v459
    %v476 = vadd.s32 %v471, %v473
    %vm477 = vc.u32 %v471, %v473
    %v478 = vadd.s32 %v474, 1
    %v479 = vsel %vm477, %v478, %v474
    %v480 = vadd.s32 %v475, %v479
    %v481 = vadd.s32 %v480, 536870912
    %v482 = vshrl.u32 %v481, 30
    %v483 = vshll.u32 %v482, 30
    %v484 = vsub.s32 %v480, %v483
    %vm485 = vcmp.lt.s32.totalorder %v484, 0
    %v486 = vsub.s32 0, %v484
    %v487 = vsel %vm485, %v486, %v484
    %v488 = vclz %v487
    %v489 = vsub.s32 %v488, 2
    %vm490 = vcmp.gt.s32.totalorder 0, %v489
    %v491 = vsel %vm490, 0, %v489
    %v492 = vsub.s32 32, %v491
    %v493 = vshll.u32 %v484, %v491
    %v494 = vshrl.u32 %v476, %v492
    %v495 = vor.u32 %v493, %v494
    %v496 = vsub.s32 4294967266, %v491
    %v497 = vadd.s32 %v496, 127
    %v498 = vshll.u32 %v497, 23
    %v499 = vor.u32 4788187, %v498
    %v500 = vand.u32 2147483647, %v499
    %v502 = vcvt.s32.f32 %v495
    %v503 = vmul.f32 %v502, %v500
    %v504 = vxor.u32 %v503, 2147483648
    %v505 = vsel %vm422, %v504, %v503
    %v506 = vsub.s32 4, %v482
    %v507 = vsel %vm422, %v506, %v482
    %v508 = vsel %vm421, %v419, %v505
    %v509 = vsel %vm421, 0, %v507
    %v510 = vcosq.f32.pop %v508
    %v511 = vsinq.f32.pop %v508
    %vm512 = vweird.f32 %v419
    %v513 = vadd.s32 %v509, 3
    %v514 = vand.u32 %v513, 3
    %vm515 = vcmp.lt.s32.totalorder %v514, 2
    %vm516 = vcmp.eq.s32.totalorder %v514, 0
    %v517 = vxor.u32 %v511, 2147483648
    %v518 = vsel %vm516, %v510, %v517
    %vm519 = vcmp.eq.s32.totalorder %v514, 2
    %v520 = vxor.u32 %v510, 2147483648
    %v521 = vsel %vm519, %v520, %v511
    %v522 = vsel %vm515, %v518, %v521
    %v523 = vsel %vm512, nan, %v522
    %v524 = vand.u32 2147483647, %v419
    %vm525 = vcmp.le.f32.partialorder %v524, 0.7853982
    %vm526 = vcmp.lt.s32.totalorder %v419, 0
    %v527 = vand.u32 %v419, 2139095040
    %v528 = vshrl.u32 %v527, 23
    %v529 = vsub.s32 %v528, 127
    %v530 = vand.u32 2147483647, %v419
    %v531 = vand.u32 %v530, 8388607
    %v532 = vor.u32 %v531, 8388608
    %v533 = vsub.s32 0, %v532
    %v534 = vadd.s32 %v529, 1
    %vm535 = vcmp.gt.s32.totalorder %v534, 0
    %v536 = vsel %vm535, %v534, 0
    %v537 = vshrl.u32 %v536, 5
    %v538 = vand.u32 %v536, 31
    %v539 = vsub.s32 32, %v538
    %v540 = vshrl.u32 683565275, %v539
    %v541 = vshll.u32 683565275, %v538
    %v542 = vshrl.u32 2475754826, %v539
    %v543 = vor.u32 %v541, %v542
    %v544 = vshll.u32 2475754826, %v538
    %v545 = vshrl.u32 2131351028, %v539
    %v546 = vor.u32 %v544, %v545
    %v547 = vshll.u32 2131351028, %v538
    %v548 = vshrl.u32 2102212464, %v539
    %v549 = vor.u32 %v547, %v548
    %v550 = vshll.u32 2102212464, %v538
    %v551 = vshrl.u32 920167782, %v539
    %v552 = vor.u32 %v550, %v551
    %v553 = vshll.u32 920167782, %v538
    %v554 = vshrl.u32 1326507024, %v539
    %v555 = vor.u32 %v553, %v554
    %vm556 = vcmp.lt.s32.totalorder %v537, 1
    %vm557 = vcmp.lt.s32.totalorder %v537, 2
    %vm558 = vcmp.lt.s32.totalorder %v537, 3
    %vm559 = vcmp.lt.s32.totalorder %v537, 4
    %v560 = vsel %vm556, %v540, %v543
    %v561 = vsel %vm559, %v549, 2102212464
    %v562 = vsel %vm558, %v546, %v561
    %v563 = vsel %vm557, %v560, %v562
    %v564 = vsel %vm556, %v543, %v546
    %v565 = vsel %vm559, %v552, 920167782
    %v566 = vsel %vm558, %v549, %v565
    %v567 = vsel %vm557, %v564, %v566
    %v568 = vsel %vm556, %v546, %v549
    %v569 = vsel %vm559, %v555, 1326507024
    %v570 = vsel %vm558, %v552, %v569
    %v571 = vsel %vm557, %v568, %v570
    %v572 = vshll.u32 %v532, 8
    %v573 = vmul.u32.u64.compose %v572, %v571
    %v574 = vextract.low.u32 %v573
    %v575 = vextract.high.u32 %v573
    %v576 = vmul.u32.u64.compose %v572, %v567
    %v577 = vextract.low.u32 %v576
    %v578 = vextract.high.u32 %v576
    %v579 = vmul.u32 %v572, %v563
    %v580 = vadd.s32 %v575, %v577
    %vm581 = vc.u32 %v575, %v577
    %v582 = vadd.s32 %v578, 1
    %v583 = vsel %vm581, %v582, %v578
    %v584 = vadd.s32 %v579, %v583
    %v585 = vadd.s32 %v584, 536870912
    %v586 = vshrl.u32 %v585, 30
    %v587 = vshll.u32 %v586, 30
    %v588 = vsub.s32 %v584, %v587
    %vm589 = vcmp.lt.s32.totalorder %v588, 0
    %v590 = vsub.s32 0, %v588
    %v591 = vsel %vm589, %v590, %v588
    %v592 = vclz %v591
    %v593 = vsub.s32 %v592, 2
    %vm594 = vcmp.gt.s32.totalorder 0, %v593
    %v595 = vsel %vm594, 0, %v593
    %v596 = vsub.s32 32, %v595
    %v597 = vshll.u32 %v588, %v595
    %v598 = vshrl.u32 %v580, %v596
    %v599 = vor.u32 %v597, %v598
    %v600 = vsub.s32 4294967266, %v595
    %v601 = vadd.s32 %v600, 127
    %v602 = vshll.u32 %v601, 23
    %v603 = vor.u32 4788187, %v602
    %v604 = vand.u32 2147483647, %v603
    %v606 = vcvt.s32.f32 %v599
    %v607 = vmul.f32 %v606, %v604
    %v608 = vxor.u32 %v607, 2147483648
    %v609 = vsel %vm526, %v608, %v607
    %v610 = vsub.s32 4, %v586
    %v611 = vsel %vm526, %v610, %v586
    %v612 = vsel %vm525, %v419, %v609
    %v613 = vsel %vm525, 0, %v611
    %v614 = vcosq.f32.pop %v612
    %v615 = vsinq.f32.pop %v612
    %vm616 = vweird.f32 %v419
    %v617 = vand.u32 %v613, 3
    %vm618 = vcmp.lt.s32.totalorder %v617, 2
    %vm619 = vcmp.eq.s32.totalorder %v617, 0
    %v620 = vxor.u32 %v615, 2147483648
    %v621 = vsel %vm619, %v614, %v620
    %vm622 = vcmp.eq.s32.totalorder %v617, 2
    %v623 = vxor.u32 %v614, 2147483648
    %v624 = vsel %vm622, %v623, %v615
    %v625 = vsel %vm618, %v621, %v624
    %v626 = vsel %vm616, nan, %v625
    %628 = vrot.lane.b32.xlu0 %v626, 8
    %v629 = vpop.permute.xlu0 %628
    %v631 = vsel %vm94, %v523, %v629
    %vm632 = vcmask 130048
    %v634 = vsel %vm632, %v408, 0
    %636 = vmatprep.subr.mxu0 0.0
    %637 = vmatpush1.msra.mxu0 0.0
    %638 = vmatprep.subr.mxu0 0.0
    %639 = vmatpush1.msra.mxu0 0.0
    %640 = vmatprep.subr.mxu0 0.0
    %641 = vmatpush1.msra.mxu0 0.0
    %642 = vmatprep.subr.mxu0 0.0
    %643 = vmatpush1.msra.mxu0 0.0
    %644 = vmatprep.subr.mxu0 0.0
    %645 = vmatpush1.msra.mxu0 0.0
    %646 = vmatprep.subr.mxu0 0.0
    %647 = vmatpush1.msra.mxu0 0.0
    %648 = vmatprep.subr.mxu0 0.0
    %649 = vmatpush1.msra.mxu0 0.0
    %650 = vmatprep.subr.mxu0 0.0
    %651 = vmatpush1.msra.mxu0 0.0
    %652 = vmatprep.subr.mxu0 0.0
    %653 = vmatpush1.msra.mxu0 0.0
    %654 = vmatprep.subr.mxu0 0.0
    %655 = vmatpush1.msra.mxu0 0.0
    %656 = vmatprep.subr.mxu0 0.0
    %657 = vmatpush1.msra.mxu0 0.0
    %658 = vmatprep.subr.mxu0 0.0
    %659 = vmatpush1.msra.mxu0 0.0
    %660 = vmatprep.subr.mxu0 0.0
    %661 = vmatpush1.msra.mxu0 0.0
    %662 = vmatprep.subr.mxu0 0.0
    %663 = vmatpush1.msra.mxu0 0.0
    %664 = vmatprep.subr.mxu0 0.0
    %665 = vmatpush1.msra.mxu0 %v79
    %666 = vmatprep.subr.mxu0 0.0
    %667 = vmatpush1.msra.mxu0 %v78
    %668 = vmatprep.subr.mxu0 0.0
    %669 = vmatpush2.msra.mxu0 0.0
    %670 = vmatprep.subr.mxu0 0.0
    %671 = vmatpush2.msra.mxu0 0.0
    %672 = vmatprep.subr.mxu0 0.0
    %673 = vmatpush2.msra.mxu0 0.0
    %674 = vmatprep.subr.mxu0 0.0
    %675 = vmatpush2.msra.mxu0 0.0
    %676 = vmatprep.subr.mxu0 0.0
    %677 = vmatpush2.msra.mxu0 0.0
    %678 = vmatprep.subr.mxu0 0.0
    %679 = vmatpush2.msra.mxu0 0.0
    %680 = vmatprep.subr.mxu0 0.0
    %681 = vmatpush2.msra.mxu0 0.0
    %682 = vmatprep.subr.mxu0 0.0
    %683 = vmatpush2.msra.mxu0 0.0
    %684 = vmatprep.subr.mxu0 0.0
    %685 = vmatpush2.msra.mxu0 0.0
    %686 = vmatprep.subr.mxu0 0.0
    %687 = vmatpush2.msra.mxu0 0.0
    %688 = vmatprep.subr.mxu0 0.0
    %689 = vmatpush2.msra.mxu0 0.0
    %690 = vmatprep.subr.mxu0 0.0
    %691 = vmatpush2.msra.mxu0 0.0
    %692 = vmatprep.subr.mxu0 0.0
    %693 = vmatpush2.msra.mxu0 0.0
    %694 = vmatprep.subr.mxu0 0.0
    %695 = vmatpush2.msra.mxu0 0.0
    %696 = vmatprep.subr.mxu0 0.0
    %697 = vmatpush2.msra.mxu0 0.0
    %698 = vmatprep.subr.mxu0 0.0
    %699 = vmatpush2.msra.mxu0 0.0
    %700 = vmatprep.mubr.f32.mxu0 0.0
    %701 = vmatmul.mubr.f32.gmra.mxu0 %v634
    %v702 = vpop.f32.mrf.mxu0
    %v703 = vadd.f32 0.0, %v702
    %v704 = vpop.f32.mrf.mxu0
    %705 = vdwg.mxu0
    %v707 = vsel %vm632, %v631, 0
    %709 = vmatprep.subr.mxu0 0.0
    %710 = vmatpush1.msra.mxu0 0.0
    %711 = vmatprep.subr.mxu0 0.0
    %712 = vmatpush1.msra.mxu0 0.0
    %713 = vmatprep.subr.mxu0 0.0
    %714 = vmatpush1.msra.mxu0 0.0
    %715 = vmatprep.subr.mxu0 0.0
    %716 = vmatpush1.msra.mxu0 0.0
    %717 = vmatprep.subr.mxu0 0.0
    %718 = vmatpush1.msra.mxu0 0.0
    %719 = vmatprep.subr.mxu0 0.0
    %720 = vmatpush1.msra.mxu0 0.0
    %721 = vmatprep.subr.mxu0 0.0
    %722 = vmatpush1.msra.mxu0 0.0
    %723 = vmatprep.subr.mxu0 0.0
    %724 = vmatpush1.msra.mxu0 0.0
    %725 = vmatprep.subr.mxu0 0.0
    %726 = vmatpush1.msra.mxu0 0.0
    %727 = vmatprep.subr.mxu0 0.0
    %728 = vmatpush1.msra.mxu0 0.0
    %729 = vmatprep.subr.mxu0 0.0
    %730 = vmatpush1.msra.mxu0 0.0
    %731 = vmatprep.subr.mxu0 0.0
    %732 = vmatpush1.msra.mxu0 0.0
    %733 = vmatprep.subr.mxu0 0.0
    %734 = vmatpush1.msra.mxu0 0.0
    %735 = vmatprep.subr.mxu0 0.0
    %736 = vmatpush1.msra.mxu0 0.0
    %737 = vmatprep.subr.mxu0 0.0
    %738 = vmatpush1.msra.mxu0 %v81
    %739 = vmatprep.subr.mxu0 0.0
    %740 = vmatpush1.msra.mxu0 %v80
    %741 = vmatprep.subr.mxu0 0.0
    %742 = vmatpush2.msra.mxu0 0.0
    %743 = vmatprep.subr.mxu0 0.0
    %744 = vmatpush2.msra.mxu0 0.0
    %745 = vmatprep.subr.mxu0 0.0
    %746 = vmatpush2.msra.mxu0 0.0
    %747 = vmatprep.subr.mxu0 0.0
    %748 = vmatpush2.msra.mxu0 0.0
    %749 = vmatprep.subr.mxu0 0.0
    %750 = vmatpush2.msra.mxu0 0.0
    %751 = vmatprep.subr.mxu0 0.0
    %752 = vmatpush2.msra.mxu0 0.0
    %753 = vmatprep.subr.mxu0 0.0
    %754 = vmatpush2.msra.mxu0 0.0
    %755 = vmatprep.subr.mxu0 0.0
    %756 = vmatpush2.msra.mxu0 0.0
    %757 = vmatprep.subr.mxu0 0.0
    %758 = vmatpush2.msra.mxu0 0.0
    %759 = vmatprep.subr.mxu0 0.0
    %760 = vmatpush2.msra.mxu0 0.0
    %761 = vmatprep.subr.mxu0 0.0
    %762 = vmatpush2.msra.mxu0 0.0
    %763 = vmatprep.subr.mxu0 0.0
    %764 = vmatpush2.msra.mxu0 0.0
    %765 = vmatprep.subr.mxu0 0.0
    %766 = vmatpush2.msra.mxu0 0.0
    %767 = vmatprep.subr.mxu0 0.0
    %768 = vmatpush2.msra.mxu0 0.0
    %769 = vmatprep.subr.mxu0 0.0
    %770 = vmatpush2.msra.mxu0 0.0
    %771 = vmatprep.subr.mxu0 0.0
    %772 = vmatpush2.msra.mxu0 0.0
    %773 = vmatprep.mubr.f32.mxu0 0.0
    %774 = vmatmul.mubr.f32.gmra.mxu0 %v707
    %v775 = vpop.f32.mrf.mxu0
    %v776 = vadd.f32 0.0, %v775
    %v777 = vpop.f32.mrf.mxu0
    %778 = vdwg.mxu0
    %v779 = vlaneseq
    %v780 = vshrl.u32 %v779, 7
    %v781 = vsub.s32 0, %v780
    %v782 = vrot.slane %v703, %v781
    %v783 = vadd.f32 %v782, %v776
    %v784 = vld [vmem:[%s0] sm:$0xff]
    %v785 = vld [vmem:[%s0 + $0x8] sm:$0xff]
    %v786 = vld [vmem:[%s0 + $0x10] sm:$0xff]
    %v787 = vld [vmem:[%s0 + $0x18] sm:$0xff]
    %788 = vmatprep.subr.mxu0 0.0
    %789 = vmatpush1.msra.mxu0 %v76
    %790 = vmatprep.subr.mxu0 0.0
    %791 = vmatpush1.msra.mxu0 %v75
    %792 = vmatprep.subr.mxu0 0.0
    %793 = vmatpush1.msra.mxu0 %v74
    %794 = vmatprep.subr.mxu0 0.0
    %795 = vmatpush1.msra.mxu0 %v73
    %796 = vmatprep.subr.mxu0 0.0
    %797 = vmatpush1.msra.mxu0 %v72
    %798 = vmatprep.subr.mxu0 0.0
    %799 = vmatpush1.msra.mxu0 %v71
    %800 = vmatprep.subr.mxu0 0.0
    %801 = vmatpush1.msra.mxu0 %v70
    %802 = vmatprep.subr.mxu0 0.0
    %803 = vmatpush1.msra.mxu0 %v69
    %804 = vmatprep.subr.mxu0 0.0
    %805 = vmatpush1.msra.mxu0 %v68
    %806 = vmatprep.subr.mxu0 0.0
    %807 = vmatpush1.msra.mxu0 %v67
    %808 = vmatprep.subr.mxu0 0.0
    %809 = vmatpush1.msra.mxu0 %v66
    %810 = vmatprep.subr.mxu0 0.0
    %811 = vmatpush1.msra.mxu0 %v65
    %812 = vmatprep.subr.mxu0 0.0
    %813 = vmatpush1.msra.mxu0 %v64
    %814 = vmatprep.subr.mxu0 0.0
    %815 = vmatpush1.msra.mxu0 %v63
    %816 = vmatprep.subr.mxu0 0.0
    %817 = vmatpush1.msra.mxu0 %v62
    %818 = vmatprep.subr.mxu0 0.0
    %819 = vmatpush1.msra.mxu0 %v61
    %820 = vmatprep.subr.mxu0 0.0
    %821 = vmatpush2.msra.mxu0 0.0
    %822 = vmatprep.subr.mxu0 0.0
    %823 = vmatpush2.msra.mxu0 0.0
    %824 = vmatprep.subr.mxu0 0.0
    %825 = vmatpush2.msra.mxu0 0.0
    %826 = vmatprep.subr.mxu0 0.0
    %827 = vmatpush2.msra.mxu0 0.0
    %828 = vmatprep.subr.mxu0 0.0
    %829 = vmatpush2.msra.mxu0 0.0
    %830 = vmatprep.subr.mxu0 0.0
    %831 = vmatpush2.msra.mxu0 0.0
    %832 = vmatprep.subr.mxu0 0.0
    %833 = vmatpush2.msra.mxu0 0.0
    %834 = vmatprep.subr.mxu0 0.0
    %835 = vmatpush2.msra.mxu0 0.0
    %836 = vmatprep.subr.mxu0 0.0
    %837 = vmatpush2.msra.mxu0 0.0
    %838 = vmatprep.subr.mxu0 0.0
    %839 = vmatpush2.msra.mxu0 0.0
    %840 = vmatprep.subr.mxu0 0.0
    %841 = vmatpush2.msra.mxu0 0.0
    %842 = vmatprep.subr.mxu0 0.0
    %843 = vmatpush2.msra.mxu0 0.0
    %844 = vmatprep.subr.mxu0 0.0
    %845 = vmatpush2.msra.mxu0 0.0
    %846 = vmatprep.subr.mxu0 0.0
    %847 = vmatpush2.msra.mxu0 0.0
    %848 = vmatprep.subr.mxu0 0.0
    %849 = vmatpush2.msra.mxu0 0.0
    %850 = vmatprep.subr.mxu0 0.0
    %851 = vmatpush2.msra.mxu0 0.0
    %852 = vmatprep.mubr.f32.mxu0 0.0
    %853 = vmatmul.mubr.f32.gmra.mxu0 %v784
    %v854 = vpop.f32.mrf.mxu0
    %v855 = vadd.f32 %v174, %v854
    %v856 = vpop.f32.mrf.mxu0
    %857 = vmatprep.mubr.f32.mxu0 0.0
    %858 = vmatmul.mubr.f32.gmra.mxu0 %v785
    %v859 = vpop.f32.mrf.mxu0
    %v860 = vadd.f32 %v179, %v859
    %v861 = vpop.f32.mrf.mxu0
    %862 = vmatprep.mubr.f32.mxu0 0.0
    %863 = vmatmul.mubr.f32.gmra.mxu0 %v786
    %v864 = vpop.f32.mrf.mxu0
    %v865 = vadd.f32 %v184, %v864
    %v866 = vpop.f32.mrf.mxu0
    %867 = vmatprep.mubr.f32.mxu0 0.0
    %868 = vmatmul.mubr.f32.gmra.mxu0 %v787
    %v869 = vpop.f32.mrf.mxu0
    %v870 = vadd.f32 %v189, %v869
    %v871 = vpop.f32.mrf.mxu0
    %872 = vdwg.mxu0
    %v873 = vlaneseq
    %v874 = vshrl.u32 %v873, 7
    %v875 = vsub.s32 0, %v874
    %v876 = vrot.slane %v783, %v875
    %v877 = vadd.f32 %v855, %v876
    %v878 = vadd.f32 %v860, %v876
    %v879 = vadd.f32 %v865, %v876
    %v880 = vadd.f32 %v870, %v876
    %v881 = vtanh.pop %v877
    %v882 = vtanh.pop %v878
    %v883 = vtanh.pop %v879
    %v884 = vtanh.pop %v880
    %v885 = vmul.f32 %v881, 0.25
    %v886 = vmul.f32 %v882, 0.25
    %v887 = vmul.f32 %v883, 0.25
    %v888 = vmul.f32 %v884, 0.25
    %v889 = vadd.f32 %v784, %v885
    %v890 = vadd.f32 %v785, %v886
    %v891 = vadd.f32 %v786, %v887
    %v892 = vadd.f32 %v787, %v888
    %893 = vmatprep.subr.mxu0 0.0
    %894 = vmatpush1.msra.mxu0 %v76
    %895 = vmatprep.subr.mxu0 0.0
    %896 = vmatpush1.msra.mxu0 %v75
    %897 = vmatprep.subr.mxu0 0.0
    %898 = vmatpush1.msra.mxu0 %v74
    %899 = vmatprep.subr.mxu0 0.0
    %900 = vmatpush1.msra.mxu0 %v73
    %901 = vmatprep.subr.mxu0 0.0
    %902 = vmatpush1.msra.mxu0 %v72
    %903 = vmatprep.subr.mxu0 0.0
    %904 = vmatpush1.msra.mxu0 %v71
    %905 = vmatprep.subr.mxu0 0.0
    %906 = vmatpush1.msra.mxu0 %v70
    %907 = vmatprep.subr.mxu0 0.0
    %908 = vmatpush1.msra.mxu0 %v69
    %909 = vmatprep.subr.mxu0 0.0
    %910 = vmatpush1.msra.mxu0 %v68
    %911 = vmatprep.subr.mxu0 0.0
    %912 = vmatpush1.msra.mxu0 %v67
    %913 = vmatprep.subr.mxu0 0.0
    %914 = vmatpush1.msra.mxu0 %v66
    %915 = vmatprep.subr.mxu0 0.0
    %916 = vmatpush1.msra.mxu0 %v65
    %917 = vmatprep.subr.mxu0 0.0
    %918 = vmatpush1.msra.mxu0 %v64
    %919 = vmatprep.subr.mxu0 0.0
    %920 = vmatpush1.msra.mxu0 %v63
    %921 = vmatprep.subr.mxu0 0.0
    %922 = vmatpush1.msra.mxu0 %v62
    %923 = vmatprep.subr.mxu0 0.0
    %924 = vmatpush1.msra.mxu0 %v61
    %925 = vmatprep.subr.mxu0 0.0
    %926 = vmatpush2.msra.mxu0 0.0
    %927 = vmatprep.subr.mxu0 0.0
    %928 = vmatpush2.msra.mxu0 0.0
    %929 = vmatprep.subr.mxu0 0.0
    %930 = vmatpush2.msra.mxu0 0.0
    %931 = vmatprep.subr.mxu0 0.0
    %932 = vmatpush2.msra.mxu0 0.0
    %933 = vmatprep.subr.mxu0 0.0
    %934 = vmatpush2.msra.mxu0 0.0
    %935 = vmatprep.subr.mxu0 0.0
    %936 = vmatpush2.msra.mxu0 0.0
    %937 = vmatprep.subr.mxu0 0.0
    %938 = vmatpush2.msra.mxu0 0.0
    %939 = vmatprep.subr.mxu0 0.0
    %940 = vmatpush2.msra.mxu0 0.0
    %941 = vmatprep.subr.mxu0 0.0
    %942 = vmatpush2.msra.mxu0 0.0
    %943 = vmatprep.subr.mxu0 0.0
    %944 = vmatpush2.msra.mxu0 0.0
    %945 = vmatprep.subr.mxu0 0.0
    %946 = vmatpush2.msra.mxu0 0.0
    %947 = vmatprep.subr.mxu0 0.0
    %948 = vmatpush2.msra.mxu0 0.0
    %949 = vmatprep.subr.mxu0 0.0
    %950 = vmatpush2.msra.mxu0 0.0
    %951 = vmatprep.subr.mxu0 0.0
    %952 = vmatpush2.msra.mxu0 0.0
    %953 = vmatprep.subr.mxu0 0.0
    %954 = vmatpush2.msra.mxu0 0.0
    %955 = vmatprep.subr.mxu0 0.0
    %956 = vmatpush2.msra.mxu0 0.0
    %957 = vmatprep.mubr.f32.mxu0 0.0
    %958 = vmatmul.mubr.f32.gmra.mxu0 %v889
    %v959 = vpop.f32.mrf.mxu0
    %v960 = vadd.f32 %v174, %v959
    %v961 = vpop.f32.mrf.mxu0
    %962 = vmatprep.mubr.f32.mxu0 0.0
    %963 = vmatmul.mubr.f32.gmra.mxu0 %v890
    %v964 = vpop.f32.mrf.mxu0
    %v965 = vadd.f32 %v179, %v964
    %v966 = vpop.f32.mrf.mxu0
    %967 = vmatprep.mubr.f32.mxu0 0.0
    %968 = vmatmul.mubr.f32.gmra.mxu0 %v891
    %v969 = vpop.f32.mrf.mxu0
    %v970 = vadd.f32 %v184, %v969
    %v971 = vpop.f32.mrf.mxu0
    %972 = vmatprep.mubr.f32.mxu0 0.0
    %973 = vmatmul.mubr.f32.gmra.mxu0 %v892
    %v974 = vpop.f32.mrf.mxu0
    %v975 = vadd.f32 %v189, %v974
    %v976 = vpop.f32.mrf.mxu0
    %977 = vdwg.mxu0
    %v978 = vlaneseq
    %v979 = vshrl.u32 %v978, 7
    %v980 = vsub.s32 1, %v979
    %v981 = vrot.slane %v783, %v980
    %v982 = vadd.f32 %v960, %v981
    %v983 = vadd.f32 %v965, %v981
    %v984 = vadd.f32 %v970, %v981
    %v985 = vadd.f32 %v975, %v981
    %v986 = vtanh.pop %v982
    %v987 = vtanh.pop %v983
    %v988 = vtanh.pop %v984
    %v989 = vtanh.pop %v985
    %v990 = vmul.f32 %v986, 0.25
    %v991 = vmul.f32 %v987, 0.25
    %v992 = vmul.f32 %v988, 0.25
    %v993 = vmul.f32 %v989, 0.25
    %v994 = vadd.f32 %v889, %v990
    %v995 = vadd.f32 %v890, %v991
    %v996 = vadd.f32 %v891, %v992
    %v997 = vadd.f32 %v892, %v993
    %998 = vmatprep.subr.mxu0 0.0
    %999 = vmatpush1.msra.mxu0 %v76
    %1000 = vmatprep.subr.mxu0 0.0
    %1001 = vmatpush1.msra.mxu0 %v75
    %1002 = vmatprep.subr.mxu0 0.0
    %1003 = vmatpush1.msra.mxu0 %v74
    %1004 = vmatprep.subr.mxu0 0.0
    %1005 = vmatpush1.msra.mxu0 %v73
    %1006 = vmatprep.subr.mxu0 0.0
    %1007 = vmatpush1.msra.mxu0 %v72
    %1008 = vmatprep.subr.mxu0 0.0
    %1009 = vmatpush1.msra.mxu0 %v71
    %1010 = vmatprep.subr.mxu0 0.0
    %1011 = vmatpush1.msra.mxu0 %v70
    %1012 = vmatprep.subr.mxu0 0.0
    %1013 = vmatpush1.msra.mxu0 %v69
    %1014 = vmatprep.subr.mxu0 0.0
    %1015 = vmatpush1.msra.mxu0 %v68
    %1016 = vmatprep.subr.mxu0 0.0
    %1017 = vmatpush1.msra.mxu0 %v67
    %1018 = vmatprep.subr.mxu0 0.0
    %1019 = vmatpush1.msra.mxu0 %v66
    %1020 = vmatprep.subr.mxu0 0.0
    %1021 = vmatpush1.msra.mxu0 %v65
    %1022 = vmatprep.subr.mxu0 0.0
    %1023 = vmatpush1.msra.mxu0 %v64
    %1024 = vmatprep.subr.mxu0 0.0
    %1025 = vmatpush1.msra.mxu0 %v63
    %1026 = vmatprep.subr.mxu0 0.0
    %1027 = vmatpush1.msra.mxu0 %v62
    %1028 = vmatprep.subr.mxu0 0.0
    %1029 = vmatpush1.msra.mxu0 %v61
    %1030 = vmatprep.subr.mxu0 0.0
    %1031 = vmatpush2.msra.mxu0 0.0
    %1032 = vmatprep.subr.mxu0 0.0
    %1033 = vmatpush2.msra.mxu0 0.0
    %1034 = vmatprep.subr.mxu0 0.0
    %1035 = vmatpush2.msra.mxu0 0.0
    %1036 = vmatprep.subr.mxu0 0.0
    %1037 = vmatpush2.msra.mxu0 0.0
    %1038 = vmatprep.subr.mxu0 0.0
    %1039 = vmatpush2.msra.mxu0 0.0
    %1040 = vmatprep.subr.mxu0 0.0
    %1041 = vmatpush2.msra.mxu0 0.0
    %1042 = vmatprep.subr.mxu0 0.0
    %1043 = vmatpush2.msra.mxu0 0.0
    %1044 = vmatprep.subr.mxu0 0.0
    %1045 = vmatpush2.msra.mxu0 0.0
    %1046 = vmatprep.subr.mxu0 0.0
    %1047 = vmatpush2.msra.mxu0 0.0
    %1048 = vmatprep.subr.mxu0 0.0
    %1049 = vmatpush2.msra.mxu0 0.0
    %1050 = vmatprep.subr.mxu0 0.0
    %1051 = vmatpush2.msra.mxu0 0.0
    %1052 = vmatprep.subr.mxu0 0.0
    %1053 = vmatpush2.msra.mxu0 0.0
    %1054 = vmatprep.subr.mxu0 0.0
    %1055 = vmatpush2.msra.mxu0 0.0
    %1056 = vmatprep.subr.mxu0 0.0
    %1057 = vmatpush2.msra.mxu0 0.0
    %1058 = vmatprep.subr.mxu0 0.0
    %1059 = vmatpush2.msra.mxu0 0.0
    %1060 = vmatprep.subr.mxu0 0.0
    %1061 = vmatpush2.msra.mxu0 0.0
    %1062 = vmatprep.mubr.f32.mxu0 0.0
    %1063 = vmatmul.mubr.f32.gmra.mxu0 %v994
    %v1064 = vpop.f32.mrf.mxu0
    %v1065 = vadd.f32 %v174, %v1064
    %v1066 = vpop.f32.mrf.mxu0
    %1067 = vmatprep.mubr.f32.mxu0 0.0
    %1068 = vmatmul.mubr.f32.gmra.mxu0 %v995
    %v1069 = vpop.f32.mrf.mxu0
    %v1070 = vadd.f32 %v179, %v1069
    %v1071 = vpop.f32.mrf.mxu0
    %1072 = vmatprep.mubr.f32.mxu0 0.0
    %1073 = vmatmul.mubr.f32.gmra.mxu0 %v996
    %v1074 = vpop.f32.mrf.mxu0
    %v1075 = vadd.f32 %v184, %v1074
    %v1076 = vpop.f32.mrf.mxu0
    %1077 = vmatprep.mubr.f32.mxu0 0.0
    %1078 = vmatmul.mubr.f32.gmra.mxu0 %v997
    %v1079 = vpop.f32.mrf.mxu0
    %v1080 = vadd.f32 %v189, %v1079
    %v1081 = vpop.f32.mrf.mxu0
    %1082 = vdwg.mxu0
    %v1083 = vlaneseq
    %v1084 = vshrl.u32 %v1083, 7
    %v1085 = vsub.s32 2, %v1084
    %v1086 = vrot.slane %v783, %v1085
    %v1087 = vadd.f32 %v1065, %v1086
    %v1088 = vadd.f32 %v1070, %v1086
    %v1089 = vadd.f32 %v1075, %v1086
    %v1090 = vadd.f32 %v1080, %v1086
    %v1091 = vtanh.pop %v1087
    %v1092 = vtanh.pop %v1088
    %v1093 = vtanh.pop %v1089
    %v1094 = vtanh.pop %v1090
    %v1095 = vmul.f32 %v1091, 0.25
    %v1096 = vmul.f32 %v1092, 0.25
    %v1097 = vmul.f32 %v1093, 0.25
    %v1098 = vmul.f32 %v1094, 0.25
    %v1099 = vadd.f32 %v994, %v1095
    %v1100 = vadd.f32 %v995, %v1096
    %v1101 = vadd.f32 %v996, %v1097
    %v1102 = vadd.f32 %v997, %v1098
    %1103 = vmatprep.subr.mxu0 0.0
    %1104 = vmatpush1.msra.mxu0 %v76
    %1105 = vmatprep.subr.mxu0 0.0
    %1106 = vmatpush1.msra.mxu0 %v75
    %1107 = vmatprep.subr.mxu0 0.0
    %1108 = vmatpush1.msra.mxu0 %v74
    %1109 = vmatprep.subr.mxu0 0.0
    %1110 = vmatpush1.msra.mxu0 %v73
    %1111 = vmatprep.subr.mxu0 0.0
    %1112 = vmatpush1.msra.mxu0 %v72
    %1113 = vmatprep.subr.mxu0 0.0
    %1114 = vmatpush1.msra.mxu0 %v71
    %1115 = vmatprep.subr.mxu0 0.0
    %1116 = vmatpush1.msra.mxu0 %v70
    %1117 = vmatprep.subr.mxu0 0.0
    %1118 = vmatpush1.msra.mxu0 %v69
    %1119 = vmatprep.subr.mxu0 0.0
    %1120 = vmatpush1.msra.mxu0 %v68
    %1121 = vmatprep.subr.mxu0 0.0
    %1122 = vmatpush1.msra.mxu0 %v67
    %1123 = vmatprep.subr.mxu0 0.0
    %1124 = vmatpush1.msra.mxu0 %v66
    %1125 = vmatprep.subr.mxu0 0.0
    %1126 = vmatpush1.msra.mxu0 %v65
    %1127 = vmatprep.subr.mxu0 0.0
    %1128 = vmatpush1.msra.mxu0 %v64
    %1129 = vmatprep.subr.mxu0 0.0
    %1130 = vmatpush1.msra.mxu0 %v63
    %1131 = vmatprep.subr.mxu0 0.0
    %1132 = vmatpush1.msra.mxu0 %v62
    %1133 = vmatprep.subr.mxu0 0.0
    %1134 = vmatpush1.msra.mxu0 %v61
    %1135 = vmatprep.subr.mxu0 0.0
    %1136 = vmatpush2.msra.mxu0 0.0
    %1137 = vmatprep.subr.mxu0 0.0
    %1138 = vmatpush2.msra.mxu0 0.0
    %1139 = vmatprep.subr.mxu0 0.0
    %1140 = vmatpush2.msra.mxu0 0.0
    %1141 = vmatprep.subr.mxu0 0.0
    %1142 = vmatpush2.msra.mxu0 0.0
    %1143 = vmatprep.subr.mxu0 0.0
    %1144 = vmatpush2.msra.mxu0 0.0
    %1145 = vmatprep.subr.mxu0 0.0
    %1146 = vmatpush2.msra.mxu0 0.0
    %1147 = vmatprep.subr.mxu0 0.0
    %1148 = vmatpush2.msra.mxu0 0.0
    %1149 = vmatprep.subr.mxu0 0.0
    %1150 = vmatpush2.msra.mxu0 0.0
    %1151 = vmatprep.subr.mxu0 0.0
    %1152 = vmatpush2.msra.mxu0 0.0
    %1153 = vmatprep.subr.mxu0 0.0
    %1154 = vmatpush2.msra.mxu0 0.0
    %1155 = vmatprep.subr.mxu0 0.0
    %1156 = vmatpush2.msra.mxu0 0.0
    %1157 = vmatprep.subr.mxu0 0.0
    %1158 = vmatpush2.msra.mxu0 0.0
    %1159 = vmatprep.subr.mxu0 0.0
    %1160 = vmatpush2.msra.mxu0 0.0
    %1161 = vmatprep.subr.mxu0 0.0
    %1162 = vmatpush2.msra.mxu0 0.0
    %1163 = vmatprep.subr.mxu0 0.0
    %1164 = vmatpush2.msra.mxu0 0.0
    %1165 = vmatprep.subr.mxu0 0.0
    %1166 = vmatpush2.msra.mxu0 0.0
    %1167 = vmatprep.mubr.f32.mxu0 0.0
    %1168 = vmatmul.mubr.f32.gmra.mxu0 %v1099
    %v1169 = vpop.f32.mrf.mxu0
    %v1170 = vadd.f32 %v174, %v1169
    %v1171 = vpop.f32.mrf.mxu0
    %1172 = vmatprep.mubr.f32.mxu0 0.0
    %1173 = vmatmul.mubr.f32.gmra.mxu0 %v1100
    %v1174 = vpop.f32.mrf.mxu0
    %v1175 = vadd.f32 %v179, %v1174
    %v1176 = vpop.f32.mrf.mxu0
    %1177 = vmatprep.mubr.f32.mxu0 0.0
    %1178 = vmatmul.mubr.f32.gmra.mxu0 %v1101
    %v1179 = vpop.f32.mrf.mxu0
    %v1180 = vadd.f32 %v184, %v1179
    %v1181 = vpop.f32.mrf.mxu0
    %1182 = vmatprep.mubr.f32.mxu0 0.0
    %1183 = vmatmul.mubr.f32.gmra.mxu0 %v1102
    %v1184 = vpop.f32.mrf.mxu0
    %v1185 = vadd.f32 %v189, %v1184
    %v1186 = vpop.f32.mrf.mxu0
    %1187 = vdwg.mxu0
    %v1188 = vlaneseq
    %v1189 = vshrl.u32 %v1188, 7
    %v1190 = vsub.s32 3, %v1189
    %v1191 = vrot.slane %v783, %v1190
    %v1192 = vadd.f32 %v1170, %v1191
    %v1193 = vadd.f32 %v1175, %v1191
    %v1194 = vadd.f32 %v1180, %v1191
    %v1195 = vadd.f32 %v1185, %v1191
    %v1196 = vtanh.pop %v1192
    %v1197 = vtanh.pop %v1193
    %v1198 = vtanh.pop %v1194
    %v1199 = vtanh.pop %v1195
    %v1200 = vmul.f32 %v1196, 0.25
    %v1201 = vmul.f32 %v1197, 0.25
    %v1202 = vmul.f32 %v1198, 0.25
    %v1203 = vmul.f32 %v1199, 0.25
    %v1204 = vadd.f32 %v1099, %v1200
    %v1205 = vadd.f32 %v1100, %v1201
    %v1206 = vadd.f32 %v1101, %v1202
    %v1207 = vadd.f32 %v1102, %v1203
    %v1208 = vld [vmem:[%s7] sm:$0x1]
    %v1210 = vlaneseq
    %v1211 = vshrl.u32 %v1210, 7
    %v1212 = vsub.s32 0, %v1211
    %v1213 = vrot.slane %v1208, %v1212
    %v1215 = vmul.f32 %v1204, %v1213
    %v1216 = vmul.f32 %v1205, %v1213
    %v1217 = vmul.f32 %v1206, %v1213
    %v1218 = vmul.f32 %v1207, %v1213
    %v1219 = vld [vmem:[%s8] sm:$0x1]
    %v1221 = vlaneseq
    %v1222 = vshrl.u32 %v1221, 7
    %v1223 = vsub.s32 0, %v1222
    %v1224 = vrot.slane %v1219, %v1223
    %v1226 = vadd.f32 %v1215, %v1224
    %v1227 = vadd.f32 %v1216, %v1224
    %v1228 = vadd.f32 %v1217, %v1224
    %v1229 = vadd.f32 %v1218, %v1224
    %1230 = vst [vmem:[#allocation7] sm:$0xff] %v1226
    %1231 = vst [vmem:[#allocation7 + $0x8] sm:$0xff] %v1227
    %1232 = vst [vmem:[#allocation7 + $0x10] sm:$0xff] %v1228
    %1233 = vst [vmem:[#allocation7 + $0x18] sm:$0xff] %v1229
    // Predicated region
    $region46: #{tpu_custom_call.1} parent=1 // pred_check
      _
    $region47: #{tpu_custom_call.1} parent=1 // pred_check_branch
      %1235 = sbr.rel (0) target = $region49
    $region48: #{tpu_custom_call.1} parent=1 // pred_region
      %s1237 = ssub.s32 512, 512
      %1238 = vsyncadd [#allocation4], %s1237
      %s1239 = sshll.u32 [#allocation7], 4
      %s1240 = int_to_ptr.vmem [resolvable:$true] %s1239
      %1245 = dma.vmem_to_hbm [thread:$0]  %s1240, 512, %s9, [#allocation4], 128, 128, 8
    $region49: #{tpu_custom_call.1} parent=1 // pred_fallthru
      _
    // Predicated region
    $region50: #{tpu_custom_call.1} parent=1 // pred_check
      _
    $region51: #{tpu_custom_call.1} parent=1 // pred_check_branch
      %1247 = sbr.rel (0) target = $region53
    $region52: #{tpu_custom_call.1} parent=1 // pred_region
      %1248 = dma.done [#allocation4], 512
    $region53: #{tpu_custom_call.1} parent=1 // pred_fallthru
      _
    %1249 = vsyncpa [#allocation3], 1
    %1250 = vsyncpa [#allocation6], 1
    %1251 = vsyncpa [#allocation4], 1

</llo_original>
